<compile_context>
chip_gen: v6e
topology: v6e:2x2x1
jax: 0.10.0
libtpu: 0.0.40
codegen_flags: <defaults>
</compile_context>

<pallas_src>
import jax
import jax.numpy as jnp
from jax import lax
from jax.experimental import pallas as pl
from jax.experimental.pallas import tpu as pltpu

NEG_SLOPE = 0.3
EPS = 1e-5


def _lrelu(v):
    return jnp.where(v > 0, v, NEG_SLOPE * v)


def _make_ep2_kernel(H, W):
    HW = H * W
    GUARD = pl.cdiv(W + 1, 128) * 128        # lane-aligned guard band for taps

    def kernel(x_ref, w1_ref, wdw_ref, w3_ref, sh_ref, o_ref, pad_ref):
        Cin = x_ref.shape[1]
        Cout = o_ref.shape[1]

        x = x_ref[0]                         # (Cin, HW)  spatial in lanes
        w1 = w1_ref[...]                     # (Cin*Cout, 1)  BN-scale folded
        wdw = wdw_ref[...]                   # (9*Cout, 1)    BN-scale folded
        w3 = w3_ref[...]                     # (Cout*Cout, 1) BN-scale folded
        sh = sh_ref[...]                     # (3*Cout, 1)    folded BN shifts

        def col(v, i):                       # (Cout, 1) column i (sublane slice)
            return v[i * Cout:(i + 1) * Cout, :]

        # ---- block 1: 1x1 conv as VPU broadcast-MACs + shift + LeakyReLU ----
        z1 = col(w1, 0) * x[0:1, :]
        for ci in range(1, Cin):
            z1 = z1 + col(w1, ci) * x[ci:ci + 1, :]
        a1 = _lrelu(z1 + col(sh, 0))         # (Cout, HW)

        # ---- block 2: 3x3 depthwise conv, padding=1 ----
        # a1 sits lane-dense in a flat scratch at aligned lane offset GUARD;
        # tap (dh, dw) is the lane window at offset GUARD + dh*W + dw.  All
        # out-of-image contributions are masked, so the guard bands are never
        # used unmasked and never need zeroing.
        pad_ref[:, GUARD:GUARD + HW] = a1

        pos = lax.broadcasted_iota(jnp.int32, (Cout, HW), 1)
        w_idx = (pos & (W - 1)) if (W & (W - 1)) == 0 else (pos % W)
        m_h = {-1: pos >= W, 1: pos < (H - 1) * W}
        m_w = {-1: w_idx >= 1, 1: w_idx <= W - 2}

        acc = a1 * col(wdw, 4)               # center tap (dh=0, dw=0)
        for dh in (-1, 0, 1):
            for dw in (-1, 0, 1):
                if dh == 0 and dw == 0:
                    continue
                k = (dh + 1) * 3 + (dw + 1)
                off = GUARD + dh * W + dw
                tap = pad_ref[:, off:off + HW]
                mask = None
                if dh != 0:
                    mask = m_h[dh]
                if dw != 0:
                    mask = m_w[dw] if mask is None else (mask & m_w[dw])
                acc = acc + jnp.where(mask, tap, 0.0) * col(wdw, k)
        a2 = _lrelu(acc + col(sh, 1))        # (Cout, HW)

        # ---- block 3: 1x1 conv as VPU broadcast-MACs + shift + LeakyReLU ----
        z3 = col(w3, 0) * a2[0:1, :]
        for ci in range(1, Cout):
            z3 = z3 + col(w3, ci) * a2[ci:ci + 1, :]
        o_ref[0] = _lrelu(z3 + col(sh, 2))

    return kernel, GUARD


def _fold(g, be, m, v, b):
    s = g / jnp.sqrt(v + EPS)                # BN scale
    t = be + s * (b - m)                     # BN shift with conv bias folded in
    return s, t


def ep2_forward(x_nchw, p):
    x = x_nchw.astype(jnp.float32)
    N, Cin, H, W = x.shape
    HW = H * W
    Cout = p['w1'].shape[0]

    s1, t1 = _fold(p['g1'], p['be1'], p['m1'], p['v1'], p['b1'])
    s2, t2 = _fold(p['g2'], p['be2'], p['m2'], p['v2'], p['b2'])
    s3, t3 = _fold(p['g3'], p['be3'], p['m3'], p['v3'], p['b3'])

    # Fold BN scales into the conv weights (per output channel = per row).
    w1f = p['w1'] * s1[:, None]              # (Cout, Cin)
    wdwf = p['wdw'] * s2[:, None]            # (Cout, 9)
    w3f = p['w3'] * s3[:, None]              # (Cout, Cout)

    # Pack weights column-major as (K*Cout, 1): column ci of the weight becomes
    # an aligned sublane block -> cheap sublane slice + lane broadcast in-kernel.
    w1c = w1f.T.reshape(Cin * Cout, 1)
    wdwc = wdwf.T.reshape(9 * Cout, 1)
    w3c = w3f.T.reshape(Cout * Cout, 1)
    shc = jnp.concatenate([t1, t2, t3]).reshape(3 * Cout, 1)

    x_flat = x.reshape(N, Cin, HW)           # NCHW -> (N, C, H*W): free reshape

    kernel, guard = _make_ep2_kernel(H, W)
    out = pl.pallas_call(
        kernel,
        out_shape=jax.ShapeDtypeStruct((N, Cout, HW), jnp.float32),
        grid_spec=pltpu.PrefetchScalarGridSpec(
            num_scalar_prefetch=0,
            grid=(N,),
            in_specs=[
                pl.BlockSpec((1, Cin, HW), lambda n: (n, 0, 0)),
                pl.BlockSpec((Cin * Cout, 1), lambda n: (0, 0)),
                pl.BlockSpec((9 * Cout, 1), lambda n: (0, 0)),
                pl.BlockSpec((Cout * Cout, 1), lambda n: (0, 0)),
                pl.BlockSpec((3 * Cout, 1), lambda n: (0, 0)),
            ],
            out_specs=pl.BlockSpec((1, Cout, HW), lambda n: (n, 0, 0)),
            scratch_shapes=[pltpu.VMEM((Cout, HW + 2 * guard), jnp.float32)],
        ),
        compiler_params=pltpu.CompilerParams(dimension_semantics=("parallel",)),
    )(x_flat, w1c, wdwc, w3c, shc)
    return out.reshape(N, Cout, H, W)


def init_params(key, cin, cout):
    ks = jax.random.split(key, 16)
    p = {}
    p['w1'] = jax.random.normal(ks[0], (cout, cin), jnp.float32) * 0.2   # (O, I)
    p['b1'] = jax.random.normal(ks[1], (cout,), jnp.float32) * 0.1
    p['wdw'] = jax.random.normal(ks[2], (cout, 9), jnp.float32) * 0.2    # (O, kh*kw)
    p['b2'] = jax.random.normal(ks[3], (cout,), jnp.float32) * 0.1
    p['w3'] = jax.random.normal(ks[4], (cout, cout), jnp.float32) * 0.2  # (O, I)
    p['b3'] = jax.random.normal(ks[5], (cout,), jnp.float32) * 0.1
    for i, n in enumerate(('1', '2', '3')):
        base = 6 + i * 3
        p['g' + n] = 0.5 + jax.random.uniform(ks[base], (cout,), jnp.float32)
        p['be' + n] = jax.random.normal(ks[base + 1], (cout,), jnp.float32) * 0.1
        p['m' + n] = jax.random.normal(ks[base + 2], (cout,), jnp.float32) * 0.1
        p['v' + n] = 0.5 + jax.random.uniform(
            jax.random.fold_in(ks[base + 2], 7), (cout,), jnp.float32)
    return p


def ep2_reference(x_nchw, p):
    """Pure-JAX reference (eval-mode BN), independent of the kernel math."""
    x = x_nchw.astype(jnp.float32)
    Cout = p['w1'].shape[0]

    def bn(z, g, be, m, v):
        inv = g / jnp.sqrt(v + EPS)
        return (z - m[None, :, None, None]) * inv[None, :, None, None] \
            + be[None, :, None, None]

    z1 = jnp.einsum('nchw,oc->nohw', x, p['w1']) + p['b1'][None, :, None, None]
    a1 = _lrelu(bn(z1, p['g1'], p['be1'], p['m1'], p['v1']))

    rhs = p['wdw'].reshape(Cout, 1, 3, 3)
    z2 = lax.conv_general_dilated(
        a1, rhs, window_strides=(1, 1), padding=((1, 1), (1, 1)),
        dimension_numbers=('NCHW', 'OIHW', 'NCHW'),
        feature_group_count=Cout) + p['b2'][None, :, None, None]
    a2 = _lrelu(bn(z2, p['g2'], p['be2'], p['m2'], p['v2']))

    z3 = jnp.einsum('nchw,oc->nohw', a2, p['w3']) + p['b3'][None, :, None, None]
    a3 = _lrelu(bn(z3, p['g3'], p['be3'], p['m3'], p['v3']))
    return a3


if __name__ == "__main__":
    key = jax.random.PRNGKey(0)
    kx, kp = jax.random.split(key)
    N, Cin, Cout, H, W = 2, 4, 8, 16, 16
    x = jax.random.normal(kx, (N, Cin, H, W), jnp.float32)   # PyTorch NCHW input
    params = init_params(kp, Cin, Cout)

    out = jax.block_until_ready(ep2_forward(x, params))
    ref = jax.block_until_ready(ep2_reference(x, params))

    assert out.shape == (N, Cout, H, W), out.shape
    max_err = float(jnp.max(jnp.abs(out - ref)))
    assert jnp.allclose(out, ref, atol=1e-4, rtol=1e-4), max_err
    print("KERNEL_OK")
</pallas_src>

<mosaic_0001>
module attributes {stable_mosaic.version = 11 : i64} {
  func.func @kernel(%arg0: i32, %arg1: memref<1x4x256xf32, #tpu.memory_space<vmem>>, %arg2: memref<32x1xf32, #tpu.memory_space<vmem>>, %arg3: memref<72x1xf32, #tpu.memory_space<vmem>>, %arg4: memref<64x1xf32, #tpu.memory_space<vmem>>, %arg5: memref<24x1xf32, #tpu.memory_space<vmem>>, %arg6: memref<1x8x256xf32, #tpu.memory_space<vmem>>, %arg7: memref<8x512xf32, #tpu.memory_space<vmem>>) attributes {dimension_semantics = [#tpu.dimension_semantics<parallel>], iteration_bounds = array<i64: 2>, scalar_prefetch = 0 : i64, scratch_operands = 1 : i64, tpu.core_type = #tpu.core_type<tc>, window_params = [{transform_indices = @transform_0, window_bounds = array<i64: 1, 4, 256>}, {pipeline_mode = #tpu.pipeline_mode<synchronous>, transform_indices = @transform_1, window_bounds = array<i64: 32, 1>}, {pipeline_mode = #tpu.pipeline_mode<synchronous>, transform_indices = @transform_2, window_bounds = array<i64: 72, 1>}, {pipeline_mode = #tpu.pipeline_mode<synchronous>, transform_indices = @transform_3, window_bounds = array<i64: 64, 1>}, {pipeline_mode = #tpu.pipeline_mode<synchronous>, transform_indices = @transform_4, window_bounds = array<i64: 24, 1>}, {transform_indices = @transform_5, window_bounds = array<i64: 1, 8, 256>}]} {
    %c0 = arith.constant 0 : index
    %c0_0 = arith.constant 0 : index
    %c0_1 = arith.constant 0 : index
    %0 = vector.load %arg1[%c0, %c0_0, %c0_1] : memref<1x4x256xf32, #tpu.memory_space<vmem>>, vector<1x4x256xf32>
    %1 = vector.shape_cast %0 : vector<1x4x256xf32> to vector<4x256xf32>
    %c0_2 = arith.constant 0 : index
    %c0_3 = arith.constant 0 : index
    %2 = vector.load %arg2[%c0_2, %c0_3] : memref<32x1xf32, #tpu.memory_space<vmem>>, vector<32x1xf32>
    %c0_4 = arith.constant 0 : index
    %c0_5 = arith.constant 0 : index
    %3 = vector.load %arg3[%c0_4, %c0_5] : memref<72x1xf32, #tpu.memory_space<vmem>>, vector<72x1xf32>
    %c0_6 = arith.constant 0 : index
    %c0_7 = arith.constant 0 : index
    %4 = vector.load %arg4[%c0_6, %c0_7] : memref<64x1xf32, #tpu.memory_space<vmem>>, vector<64x1xf32>
    %c0_8 = arith.constant 0 : index
    %c0_9 = arith.constant 0 : index
    %5 = vector.load %arg5[%c0_8, %c0_9] : memref<24x1xf32, #tpu.memory_space<vmem>>, vector<24x1xf32>
    %6 = vector.extract_strided_slice %2 {offsets = [0, 0], sizes = [8, 1], strides = [1, 1]} : vector<32x1xf32> to vector<8x1xf32>
    %7 = vector.extract_strided_slice %1 {offsets = [0, 0], sizes = [1, 256], strides = [1, 1]} : vector<4x256xf32> to vector<1x256xf32>
    %8 = vector.broadcast %6 : vector<8x1xf32> to vector<8x256xf32>
    %9 = vector.broadcast %7 : vector<1x256xf32> to vector<8x256xf32>
    %10 = arith.mulf %8, %9 : vector<8x256xf32>
    %11 = vector.extract_strided_slice %2 {offsets = [8, 0], sizes = [8, 1], strides = [1, 1]} : vector<32x1xf32> to vector<8x1xf32>
    %12 = vector.extract_strided_slice %1 {offsets = [1, 0], sizes = [1, 256], strides = [1, 1]} : vector<4x256xf32> to vector<1x256xf32>
    %13 = vector.broadcast %11 : vector<8x1xf32> to vector<8x256xf32>
    %14 = vector.broadcast %12 : vector<1x256xf32> to vector<8x256xf32>
    %15 = arith.mulf %13, %14 : vector<8x256xf32>
    %16 = arith.addf %10, %15 : vector<8x256xf32>
    %17 = vector.extract_strided_slice %2 {offsets = [16, 0], sizes = [8, 1], strides = [1, 1]} : vector<32x1xf32> to vector<8x1xf32>
    %18 = vector.extract_strided_slice %1 {offsets = [2, 0], sizes = [1, 256], strides = [1, 1]} : vector<4x256xf32> to vector<1x256xf32>
    %19 = vector.broadcast %17 : vector<8x1xf32> to vector<8x256xf32>
    %20 = vector.broadcast %18 : vector<1x256xf32> to vector<8x256xf32>
    %21 = arith.mulf %19, %20 : vector<8x256xf32>
    %22 = arith.addf %16, %21 : vector<8x256xf32>
    %23 = vector.extract_strided_slice %2 {offsets = [24, 0], sizes = [8, 1], strides = [1, 1]} : vector<32x1xf32> to vector<8x1xf32>
    %24 = vector.extract_strided_slice %1 {offsets = [3, 0], sizes = [1, 256], strides = [1, 1]} : vector<4x256xf32> to vector<1x256xf32>
    %25 = vector.broadcast %23 : vector<8x1xf32> to vector<8x256xf32>
    %26 = vector.broadcast %24 : vector<1x256xf32> to vector<8x256xf32>
    %27 = arith.mulf %25, %26 : vector<8x256xf32>
    %28 = arith.addf %22, %27 : vector<8x256xf32>
    %29 = vector.extract_strided_slice %5 {offsets = [0, 0], sizes = [8, 1], strides = [1, 1]} : vector<24x1xf32> to vector<8x1xf32>
    %30 = vector.broadcast %29 : vector<8x1xf32> to vector<8x256xf32>
    %31 = arith.addf %28, %30 : vector<8x256xf32>
    %cst = arith.constant 0.000000e+00 : f32
    %32 = vector.broadcast %cst : f32 to vector<8x256xf32>
    %33 = arith.cmpf ogt, %31, %32 : vector<8x256xf32>
    %cst_10 = arith.constant 3.000000e-01 : f32
    %34 = vector.broadcast %cst_10 : f32 to vector<8x256xf32>
    %35 = arith.mulf %34, %31 : vector<8x256xf32>
    %36 = arith.select %33, %31, %35 : vector<8x256xi1>, vector<8x256xf32>
    %c0_11 = arith.constant 0 : index
    %c128 = arith.constant 128 : index
    %37 = vector.load %arg7[%c0_11, %c128] : memref<8x512xf32, #tpu.memory_space<vmem>>, vector<8x256xf32>
    tpu.vector_store %arg7[%c0_11, %c128], %36 {strides = array<i32>} : memref<8x512xf32, #tpu.memory_space<vmem>>, vector<8x256xf32>,
    %38 = tpu.iota {dimensions = array<i32: 1>} : vector<8x256xi32>
    %c15_i32 = arith.constant 15 : i32
    %39 = vector.broadcast %c15_i32 : i32 to vector<8x256xi32>
    %40 = arith.andi %38, %39 : vector<8x256xi32>
    %c16_i32 = arith.constant 16 : i32
    %41 = vector.broadcast %c16_i32 : i32 to vector<8x256xi32>
    %42 = arith.cmpi sge, %38, %41 : vector<8x256xi32>
    %c240_i32 = arith.constant 240 : i32
    %43 = vector.broadcast %c240_i32 : i32 to vector<8x256xi32>
    %44 = arith.cmpi slt, %38, %43 : vector<8x256xi32>
    %c1_i32 = arith.constant 1 : i32
    %45 = vector.broadcast %c1_i32 : i32 to vector<8x256xi32>
    %46 = arith.cmpi sge, %40, %45 : vector<8x256xi32>
    %c14_i32 = arith.constant 14 : i32
    %47 = vector.broadcast %c14_i32 : i32 to vector<8x256xi32>
    %48 = arith.cmpi sle, %40, %47 : vector<8x256xi32>
    %49 = vector.extract_strided_slice %3 {offsets = [32, 0], sizes = [8, 1], strides = [1, 1]} : vector<72x1xf32> to vector<8x1xf32>
    %50 = vector.broadcast %49 : vector<8x1xf32> to vector<8x256xf32>
    %51 = arith.mulf %36, %50 : vector<8x256xf32>
    %c0_12 = arith.constant 0 : index
    %c111 = arith.constant 111 : index
    %52 = vector.load %arg7[%c0_12, %c111] : memref<8x512xf32, #tpu.memory_space<vmem>>, vector<8x256xf32>
    %53 = arith.andi %42, %46 : vector<8x256xi1>
    %cst_13 = arith.constant 0.000000e+00 : f32
    %54 = vector.broadcast %cst_13 : f32 to vector<8x256xf32>
    %55 = arith.select %53, %52, %54 : vector<8x256xi1>, vector<8x256xf32>
    %56 = vector.extract_strided_slice %3 {offsets = [0, 0], sizes = [8, 1], strides = [1, 1]} : vector<72x1xf32> to vector<8x1xf32>
    %57 = vector.broadcast %56 : vector<8x1xf32> to vector<8x256xf32>
    %58 = arith.mulf %55, %57 : vector<8x256xf32>
    %59 = arith.addf %51, %58 : vector<8x256xf32>
    %c0_14 = arith.constant 0 : index
    %c112 = arith.constant 112 : index
    %60 = vector.load %arg7[%c0_14, %c112] : memref<8x512xf32, #tpu.memory_space<vmem>>, vector<8x256xf32>
    %cst_15 = arith.constant 0.000000e+00 : f32
    %61 = vector.broadcast %cst_15 : f32 to vector<8x256xf32>
    %62 = arith.select %42, %60, %61 : vector<8x256xi1>, vector<8x256xf32>
    %63 = vector.extract_strided_slice %3 {offsets = [8, 0], sizes = [8, 1], strides = [1, 1]} : vector<72x1xf32> to vector<8x1xf32>
    %64 = vector.broadcast %63 : vector<8x1xf32> to vector<8x256xf32>
    %65 = arith.mulf %62, %64 : vector<8x256xf32>
    %66 = arith.addf %59, %65 : vector<8x256xf32>
    %c0_16 = arith.constant 0 : index
    %c113 = arith.constant 113 : index
    %67 = vector.load %arg7[%c0_16, %c113] : memref<8x512xf32, #tpu.memory_space<vmem>>, vector<8x256xf32>
    %68 = arith.andi %42, %48 : vector<8x256xi1>
    %cst_17 = arith.constant 0.000000e+00 : f32
    %69 = vector.broadcast %cst_17 : f32 to vector<8x256xf32>
    %70 = arith.select %68, %67, %69 : vector<8x256xi1>, vector<8x256xf32>
    %71 = vector.extract_strided_slice %3 {offsets = [16, 0], sizes = [8, 1], strides = [1, 1]} : vector<72x1xf32> to vector<8x1xf32>
    %72 = vector.broadcast %71 : vector<8x1xf32> to vector<8x256xf32>
    %73 = arith.mulf %70, %72 : vector<8x256xf32>
    %74 = arith.addf %66, %73 : vector<8x256xf32>
    %c0_18 = arith.constant 0 : index
    %c127 = arith.constant 127 : index
    %75 = vector.load %arg7[%c0_18, %c127] : memref<8x512xf32, #tpu.memory_space<vmem>>, vector<8x256xf32>
    %cst_19 = arith.constant 0.000000e+00 : f32
    %76 = vector.broadcast %cst_19 : f32 to vector<8x256xf32>
    %77 = arith.select %46, %75, %76 : vector<8x256xi1>, vector<8x256xf32>
    %78 = vector.extract_strided_slice %3 {offsets = [24, 0], sizes = [8, 1], strides = [1, 1]} : vector<72x1xf32> to vector<8x1xf32>
    %79 = vector.broadcast %78 : vector<8x1xf32> to vector<8x256xf32>
    %80 = arith.mulf %77, %79 : vector<8x256xf32>
    %81 = arith.addf %74, %80 : vector<8x256xf32>
    %c0_20 = arith.constant 0 : index
    %c129 = arith.constant 129 : index
    %82 = vector.load %arg7[%c0_20, %c129] : memref<8x512xf32, #tpu.memory_space<vmem>>, vector<8x256xf32>
    %cst_21 = arith.constant 0.000000e+00 : f32
    %83 = vector.broadcast %cst_21 : f32 to vector<8x256xf32>
    %84 = arith.select %48, %82, %83 : vector<8x256xi1>, vector<8x256xf32>
    %85 = vector.extract_strided_slice %3 {offsets = [40, 0], sizes = [8, 1], strides = [1, 1]} : vector<72x1xf32> to vector<8x1xf32>
    %86 = vector.broadcast %85 : vector<8x1xf32> to vector<8x256xf32>
    %87 = arith.mulf %84, %86 : vector<8x256xf32>
    %88 = arith.addf %81, %87 : vector<8x256xf32>
    %c0_22 = arith.constant 0 : index
    %c143 = arith.constant 143 : index
    %89 = vector.load %arg7[%c0_22, %c143] : memref<8x512xf32, #tpu.memory_space<vmem>>, vector<8x256xf32>
    %90 = arith.andi %44, %46 : vector<8x256xi1>
    %cst_23 = arith.constant 0.000000e+00 : f32
    %91 = vector.broadcast %cst_23 : f32 to vector<8x256xf32>
    %92 = arith.select %90, %89, %91 : vector<8x256xi1>, vector<8x256xf32>
    %93 = vector.extract_strided_slice %3 {offsets = [48, 0], sizes = [8, 1], strides = [1, 1]} : vector<72x1xf32> to vector<8x1xf32>
    %94 = vector.broadcast %93 : vector<8x1xf32> to vector<8x256xf32>
    %95 = arith.mulf %92, %94 : vector<8x256xf32>
    %96 = arith.addf %88, %95 : vector<8x256xf32>
    %c0_24 = arith.constant 0 : index
    %c144 = arith.constant 144 : index
    %97 = vector.load %arg7[%c0_24, %c144] : memref<8x512xf32, #tpu.memory_space<vmem>>, vector<8x256xf32>
    %cst_25 = arith.constant 0.000000e+00 : f32
    %98 = vector.broadcast %cst_25 : f32 to vector<8x256xf32>
    %99 = arith.select %44, %97, %98 : vector<8x256xi1>, vector<8x256xf32>
    %100 = vector.extract_strided_slice %3 {offsets = [56, 0], sizes = [8, 1], strides = [1, 1]} : vector<72x1xf32> to vector<8x1xf32>
    %101 = vector.broadcast %100 : vector<8x1xf32> to vector<8x256xf32>
    %102 = arith.mulf %99, %101 : vector<8x256xf32>
    %103 = arith.addf %96, %102 : vector<8x256xf32>
    %c0_26 = arith.constant 0 : index
    %c145 = arith.constant 145 : index
    %104 = vector.load %arg7[%c0_26, %c145] : memref<8x512xf32, #tpu.memory_space<vmem>>, vector<8x256xf32>
    %105 = arith.andi %44, %48 : vector<8x256xi1>
    %cst_27 = arith.constant 0.000000e+00 : f32
    %106 = vector.broadcast %cst_27 : f32 to vector<8x256xf32>
    %107 = arith.select %105, %104, %106 : vector<8x256xi1>, vector<8x256xf32>
    %108 = vector.extract_strided_slice %3 {offsets = [64, 0], sizes = [8, 1], strides = [1, 1]} : vector<72x1xf32> to vector<8x1xf32>
    %109 = vector.broadcast %108 : vector<8x1xf32> to vector<8x256xf32>
    %110 = arith.mulf %107, %109 : vector<8x256xf32>
    %111 = arith.addf %103, %110 : vector<8x256xf32>
    %112 = vector.extract_strided_slice %5 {offsets = [8, 0], sizes = [8, 1], strides = [1, 1]} : vector<24x1xf32> to vector<8x1xf32>
    %113 = vector.broadcast %112 : vector<8x1xf32> to vector<8x256xf32>
    %114 = arith.addf %111, %113 : vector<8x256xf32>
    %cst_28 = arith.constant 0.000000e+00 : f32
    %115 = vector.broadcast %cst_28 : f32 to vector<8x256xf32>
    %116 = arith.cmpf ogt, %114, %115 : vector<8x256xf32>
    %cst_29 = arith.constant 3.000000e-01 : f32
    %117 = vector.broadcast %cst_29 : f32 to vector<8x256xf32>
    %118 = arith.mulf %117, %114 : vector<8x256xf32>
    %119 = arith.select %116, %114, %118 : vector<8x256xi1>, vector<8x256xf32>
    %120 = vector.extract_strided_slice %4 {offsets = [0, 0], sizes = [8, 1], strides = [1, 1]} : vector<64x1xf32> to vector<8x1xf32>
    %121 = vector.extract_strided_slice %119 {offsets = [0, 0], sizes = [1, 256], strides = [1, 1]} : vector<8x256xf32> to vector<1x256xf32>
    %122 = vector.broadcast %120 : vector<8x1xf32> to vector<8x256xf32>
    %123 = vector.broadcast %121 : vector<1x256xf32> to vector<8x256xf32>
    %124 = arith.mulf %122, %123 : vector<8x256xf32>
    %125 = vector.extract_strided_slice %4 {offsets = [8, 0], sizes = [8, 1], strides = [1, 1]} : vector<64x1xf32> to vector<8x1xf32>
    %126 = vector.extract_strided_slice %119 {offsets = [1, 0], sizes = [1, 256], strides = [1, 1]} : vector<8x256xf32> to vector<1x256xf32>
    %127 = vector.broadcast %125 : vector<8x1xf32> to vector<8x256xf32>
    %128 = vector.broadcast %126 : vector<1x256xf32> to vector<8x256xf32>
    %129 = arith.mulf %127, %128 : vector<8x256xf32>
    %130 = arith.addf %124, %129 : vector<8x256xf32>
    %131 = vector.extract_strided_slice %4 {offsets = [16, 0], sizes = [8, 1], strides = [1, 1]} : vector<64x1xf32> to vector<8x1xf32>
    %132 = vector.extract_strided_slice %119 {offsets = [2, 0], sizes = [1, 256], strides = [1, 1]} : vector<8x256xf32> to vector<1x256xf32>
    %133 = vector.broadcast %131 : vector<8x1xf32> to vector<8x256xf32>
    %134 = vector.broadcast %132 : vector<1x256xf32> to vector<8x256xf32>
    %135 = arith.mulf %133, %134 : vector<8x256xf32>
    %136 = arith.addf %130, %135 : vector<8x256xf32>
    %137 = vector.extract_strided_slice %4 {offsets = [24, 0], sizes = [8, 1], strides = [1, 1]} : vector<64x1xf32> to vector<8x1xf32>
    %138 = vector.extract_strided_slice %119 {offsets = [3, 0], sizes = [1, 256], strides = [1, 1]} : vector<8x256xf32> to vector<1x256xf32>
    %139 = vector.broadcast %137 : vector<8x1xf32> to vector<8x256xf32>
    %140 = vector.broadcast %138 : vector<1x256xf32> to vector<8x256xf32>
    %141 = arith.mulf %139, %140 : vector<8x256xf32>
    %142 = arith.addf %136, %141 : vector<8x256xf32>
    %143 = vector.extract_strided_slice %4 {offsets = [32, 0], sizes = [8, 1], strides = [1, 1]} : vector<64x1xf32> to vector<8x1xf32>
    %144 = vector.extract_strided_slice %119 {offsets = [4, 0], sizes = [1, 256], strides = [1, 1]} : vector<8x256xf32> to vector<1x256xf32>
    %145 = vector.broadcast %143 : vector<8x1xf32> to vector<8x256xf32>
    %146 = vector.broadcast %144 : vector<1x256xf32> to vector<8x256xf32>
    %147 = arith.mulf %145, %146 : vector<8x256xf32>
    %148 = arith.addf %142, %147 : vector<8x256xf32>
    %149 = vector.extract_strided_slice %4 {offsets = [40, 0], sizes = [8, 1], strides = [1, 1]} : vector<64x1xf32> to vector<8x1xf32>
    %150 = vector.extract_strided_slice %119 {offsets = [5, 0], sizes = [1, 256], strides = [1, 1]} : vector<8x256xf32> to vector<1x256xf32>
    %151 = vector.broadcast %149 : vector<8x1xf32> to vector<8x256xf32>
    %152 = vector.broadcast %150 : vector<1x256xf32> to vector<8x256xf32>
    %153 = arith.mulf %151, %152 : vector<8x256xf32>
    %154 = arith.addf %148, %153 : vector<8x256xf32>
    %155 = vector.extract_strided_slice %4 {offsets = [48, 0], sizes = [8, 1], strides = [1, 1]} : vector<64x1xf32> to vector<8x1xf32>
    %156 = vector.extract_strided_slice %119 {offsets = [6, 0], sizes = [1, 256], strides = [1, 1]} : vector<8x256xf32> to vector<1x256xf32>
    %157 = vector.broadcast %155 : vector<8x1xf32> to vector<8x256xf32>
    %158 = vector.broadcast %156 : vector<1x256xf32> to vector<8x256xf32>
    %159 = arith.mulf %157, %158 : vector<8x256xf32>
    %160 = arith.addf %154, %159 : vector<8x256xf32>
    %161 = vector.extract_strided_slice %4 {offsets = [56, 0], sizes = [8, 1], strides = [1, 1]} : vector<64x1xf32> to vector<8x1xf32>
    %162 = vector.extract_strided_slice %119 {offsets = [7, 0], sizes = [1, 256], strides = [1, 1]} : vector<8x256xf32> to vector<1x256xf32>
    %163 = vector.broadcast %161 : vector<8x1xf32> to vector<8x256xf32>
    %164 = vector.broadcast %162 : vector<1x256xf32> to vector<8x256xf32>
    %165 = arith.mulf %163, %164 : vector<8x256xf32>
    %166 = arith.addf %160, %165 : vector<8x256xf32>
    %167 = vector.extract_strided_slice %5 {offsets = [16, 0], sizes = [8, 1], strides = [1, 1]} : vector<24x1xf32> to vector<8x1xf32>
    %168 = vector.broadcast %167 : vector<8x1xf32> to vector<8x256xf32>
    %169 = arith.addf %166, %168 : vector<8x256xf32>
    %cst_30 = arith.constant 0.000000e+00 : f32
    %170 = vector.broadcast %cst_30 : f32 to vector<8x256xf32>
    %171 = arith.cmpf ogt, %169, %170 : vector<8x256xf32>
    %cst_31 = arith.constant 3.000000e-01 : f32
    %172 = vector.broadcast %cst_31 : f32 to vector<8x256xf32>
    %173 = arith.mulf %172, %169 : vector<8x256xf32>
    %174 = arith.select %171, %169, %173 : vector<8x256xi1>, vector<8x256xf32>
    %c0_32 = arith.constant 0 : index
    %c0_33 = arith.constant 0 : index
    %c0_34 = arith.constant 0 : index
    %175 = vector.load %arg6[%c0_32, %c0_33, %c0_34] : memref<1x8x256xf32, #tpu.memory_space<vmem>>, vector<1x8x256xf32>
    %176 = vector.shape_cast %175 : vector<1x8x256xf32> to vector<8x256xf32>
    %177 = vector.shape_cast %174 : vector<8x256xf32> to vector<1x8x256xf32>
    tpu.vector_store %arg6[%c0_32, %c0_33, %c0_34], %177 {strides = array<i32>} : memref<1x8x256xf32, #tpu.memory_space<vmem>>, vector<1x8x256xf32>,
    return
  }
  func.func @transform_0(%arg0: i32) -> (i32, i32, i32) {
    %c0_i32 = arith.constant 0 : i32
    %c0_i32_0 = arith.constant 0 : i32
    %c0_i32_1 = arith.constant 0 : i32
    return %arg0, %c0_i32, %c0_i32_0 : i32, i32, i32
  }
  func.func @transform_1(%arg0: i32) -> (i32, i32) {
    %c0_i32 = arith.constant 0 : i32
    %c0_i32_0 = arith.constant 0 : i32
    %c0_i32_1 = arith.constant 0 : i32
    return %c0_i32, %c0_i32_0 : i32, i32
  }
  func.func @transform_2(%arg0: i32) -> (i32, i32) {
    %c0_i32 = arith.constant 0 : i32
    %c0_i32_0 = arith.constant 0 : i32
    %c0_i32_1 = arith.constant 0 : i32
    return %c0_i32, %c0_i32_0 : i32, i32
  }
  func.func @transform_3(%arg0: i32) -> (i32, i32) {
    %c0_i32 = arith.constant 0 : i32
    %c0_i32_0 = arith.constant 0 : i32
    %c0_i32_1 = arith.constant 0 : i32
    return %c0_i32, %c0_i32_0 : i32, i32
  }
  func.func @transform_4(%arg0: i32) -> (i32, i32) {
    %c0_i32 = arith.constant 0 : i32
    %c0_i32_0 = arith.constant 0 : i32
    %c0_i32_1 = arith.constant 0 : i32
    return %c0_i32, %c0_i32_0 : i32, i32
  }
  func.func @transform_5(%arg0: i32) -> (i32, i32, i32) {
    %c0_i32 = arith.constant 0 : i32
    %c0_i32_0 = arith.constant 0 : i32
    %c0_i32_1 = arith.constant 0 : i32
    return %arg0, %c0_i32, %c0_i32_0 : i32, i32, i32
  }
}

</mosaic_0001>

<llo_original>
// kernel: tpu_custom_call.1
$region0: #{tpu_custom_call.1}
  #allocation0 [shape = 'u32[]', space=smem, size = 0x4, offset = 0x4, fixed_abs, tag = 'smem constant byte address 0x4 - core index']
  #allocation1 [shape = 'u32[144,128]{1,0:T(1,128)}', space=vmem, size = 0x12000, scoped, tag = 'internal scratch']
  #allocation2 [shape = 'f32[8,512]{1,0:T(8,128)}', space=vmem, size = 0x4000, scoped, tag = 'scratch operand']
  %s0 = inlined_call_operand.vmem [shape: f32[2,4,256], index: 0, kind: input, shape index: {}]
  %s1 = inlined_call_operand.vmem [shape: f32[32,1], index: 1, kind: input, shape index: {}]
  %s2 = inlined_call_operand.vmem [shape: f32[72,1], index: 2, kind: input, shape index: {}]
  %s3 = inlined_call_operand.vmem [shape: f32[64,1], index: 3, kind: input, shape index: {}]
  %s4 = inlined_call_operand.vmem [shape: f32[24,1], index: 4, kind: input, shape index: {}]
  %s5 = inlined_call_operand.hbm [shape: f32[2,8,256], index: 5, kind: output, shape index: {}]
  %s6 = sld [smem:[#allocation0]]
  $region53: #{tpu_custom_call.1} parent=0
    _
  %s8 = ssub.s32 1, %s6
  %s9 = scalar_select 0, %s8, %s6
  $region1: #{tpu_custom_call.1} parent=0
    #allocation3 [shape = 'u8[16384]{0}', space=vmem, size = 0x4000, scoped, tag = 'output window, operand 0']
    #allocation4 [shape = 's32[2]{0}', space=sflag, size = 0x8, scoped, tag = 'scoped memory for tpu_custom_call.1']
    %10 = vsyncpa [#allocation4], 0
    %s11 = scalar_lea.sflag [#allocation4], 1
    %12 = vsyncpa %s11, 0
    loop: start=0, step=1, limit=4
    $region2: #{tpu_custom_call.1} parent=1 // loop_pre_header
      _
    $region3: #{tpu_custom_call.1} parent=1 // loop_header
      %s14 = sphi 0, %s18
      %p15 = scmp.ge.s32.totalorder %s14, 4
      %s24 = sphi 0, %s26
      %s27 = sphi 0, %s24
      %s28 = sphi 0, %s27
      %s44 = sphi 0, %s28
      %s48 = sphi 0, %s48
      %s50 = sphi 0, %s48
      %s51 = sphi 0, %s50
      %s65 = sphi 0, %s51
      %s69 = sphi 0, %s69
      %s71 = sphi 0, %s69
      %s72 = sphi 0, %s71
      %s86 = sphi 0, %s72
      %s90 = sphi 0, %s90
      %s92 = sphi 0, %s90
      %s93 = sphi 0, %s92
      %s107 = sphi 0, %s93
      %s111 = sphi 0, %s111
      %s113 = sphi 0, %s111
      %s114 = sphi 0, %s113
      %s128 = sphi 0, %s114
      %s134 = sphi 0, %s136
      %s137 = sphi 0, %s134
      %s138 = sphi 0, %s137
      %s154 = sphi 0, %s138
    $region4: #{tpu_custom_call.1} parent=1 // loop_header_branch
      %17 = sbr.rel (%p15) target = $region8
    $region5: #{tpu_custom_call.1} parent=1 // loop_body
      %s19 = ssub.s32 %s14, 1
      %s20 = ssub.s32 %s14, 2
      %s21 = sadd.s32 %s14, 1
      %s22 = ssub.s32 %s14, %s21
      %p23 = scmp.eq.s32.totalorder %s22, 0
      %s25 = sadd.s32 %s24, 1
      %s26 = scalar_select %p23, %s24, %s25
      %p29 = pneg %p23
      %p30 = scmp.eq.s32.totalorder %s14, 1
      %p31 = por %p29, %p30
      %p32 = scmp.ne.s32.totalorder %s24, %s27
      %p33 = scmp.eq.s32.totalorder %s14, 0
      %p34 = por %p32, %p33
      %p35 = scmp.ne.s32.totalorder %s24, %s27
      %p36 = scmp.eq.s32.totalorder %s19, 1
      %p37 = por %p35, %p36
      %p38 = scmp.ne.s32.totalorder %s27, %s28
      %p39 = scmp.eq.s32.totalorder %s19, 0
      %p40 = por %p38, %p39
      %p41 = scmp.ne.s32.totalorder %s27, %s28
      %p42 = scmp.eq.s32.totalorder %s20, 1
      %p43 = por %p41, %p42
      %p45 = scmp.ne.s32.totalorder %s28, %s44
      %p46 = scmp.eq.s32.totalorder %s20, 0
      %p47 = por %p45, %p46
      %s49 = sadd.s32 %s48, 1
      %p52 = scmp.eq.s32.totalorder %s14, 1
      %p53 = scmp.ne.s32.totalorder %s48, %s50
      %p54 = scmp.eq.s32.totalorder %s14, 0
      %p55 = por %p53, %p54
      %p56 = scmp.ne.s32.totalorder %s48, %s50
      %p57 = scmp.eq.s32.totalorder %s19, 1
      %p58 = por %p56, %p57
      %p59 = scmp.ne.s32.totalorder %s50, %s51
      %p60 = scmp.eq.s32.totalorder %s19, 0
      %p61 = por %p59, %p60
      %p62 = scmp.ne.s32.totalorder %s50, %s51
      %p63 = scmp.eq.s32.totalorder %s20, 1
      %p64 = por %p62, %p63
      %p66 = scmp.ne.s32.totalorder %s51, %s65
      %p67 = scmp.eq.s32.totalorder %s20, 0
      %p68 = por %p66, %p67
      %s70 = sadd.s32 %s69, 1
      %p73 = scmp.eq.s32.totalorder %s14, 1
      %p74 = scmp.ne.s32.totalorder %s69, %s71
      %p75 = scmp.eq.s32.totalorder %s14, 0
      %p76 = por %p74, %p75
      %p77 = scmp.ne.s32.totalorder %s69, %s71
      %p78 = scmp.eq.s32.totalorder %s19, 1
      %p79 = por %p77, %p78
      %p80 = scmp.ne.s32.totalorder %s71, %s72
      %p81 = scmp.eq.s32.totalorder %s19, 0
      %p82 = por %p80, %p81
      %p83 = scmp.ne.s32.totalorder %s71, %s72
      %p84 = scmp.eq.s32.totalorder %s20, 1
      %p85 = por %p83, %p84
      %p87 = scmp.ne.s32.totalorder %s72, %s86
      %p88 = scmp.eq.s32.totalorder %s20, 0
      %p89 = por %p87, %p88
      %s91 = sadd.s32 %s90, 1
      %p94 = scmp.eq.s32.totalorder %s14, 1
      %p95 = scmp.ne.s32.totalorder %s90, %s92
      %p96 = scmp.eq.s32.totalorder %s14, 0
      %p97 = por %p95, %p96
      %p98 = scmp.ne.s32.totalorder %s90, %s92
      %p99 = scmp.eq.s32.totalorder %s19, 1
      %p100 = por %p98, %p99
      %p101 = scmp.ne.s32.totalorder %s92, %s93
      %p102 = scmp.eq.s32.totalorder %s19, 0
      %p103 = por %p101, %p102
      %p104 = scmp.ne.s32.totalorder %s92, %s93
      %p105 = scmp.eq.s32.totalorder %s20, 1
      %p106 = por %p104, %p105
      %p108 = scmp.ne.s32.totalorder %s93, %s107
      %p109 = scmp.eq.s32.totalorder %s20, 0
      %p110 = por %p108, %p109
      %s112 = sadd.s32 %s111, 1
      %p115 = scmp.eq.s32.totalorder %s14, 1
      %p116 = scmp.ne.s32.totalorder %s111, %s113
      %p117 = scmp.eq.s32.totalorder %s14, 0
      %p118 = por %p116, %p117
      %p119 = scmp.ne.s32.totalorder %s111, %s113
      %p120 = scmp.eq.s32.totalorder %s19, 1
      %p121 = por %p119, %p120
      %p122 = scmp.ne.s32.totalorder %s113, %s114
      %p123 = scmp.eq.s32.totalorder %s19, 0
      %p124 = por %p122, %p123
      %p125 = scmp.ne.s32.totalorder %s113, %s114
      %p126 = scmp.eq.s32.totalorder %s20, 1
      %p127 = por %p125, %p126
      %p129 = scmp.ne.s32.totalorder %s114, %s128
      %p130 = scmp.eq.s32.totalorder %s20, 0
      %p131 = por %p129, %p130
      %s132 = ssub.s32 %s14, %s21
      %p133 = scmp.eq.s32.totalorder %s132, 0
      %s135 = sadd.s32 %s134, 1
      %s136 = scalar_select %p133, %s134, %s135
      %p139 = pneg %p133
      %p140 = scmp.eq.s32.totalorder %s14, 1
      %p141 = por %p139, %p140
      %p142 = scmp.ne.s32.totalorder %s134, %s137
      %p143 = scmp.eq.s32.totalorder %s14, 0
      %p144 = por %p142, %p143
      %p145 = scmp.ne.s32.totalorder %s134, %s137
      %p146 = scmp.eq.s32.totalorder %s19, 1
      %p147 = por %p145, %p146
      %p148 = scmp.ne.s32.totalorder %s137, %s138
      %p149 = scmp.eq.s32.totalorder %s19, 0
      %p150 = por %p148, %p149
      %p151 = scmp.ne.s32.totalorder %s137, %s138
      %p152 = scmp.eq.s32.totalorder %s20, 1
      %p153 = por %p151, %p152
      %p155 = scmp.ne.s32.totalorder %s138, %s154
      %p156 = scmp.eq.s32.totalorder %s20, 0
      %p157 = por %p155, %p156
      %p158 = scmp.le.s32.totalorder 1, %s14
      %p159 = scmp.lt.s32.totalorder %s14, 3
      %p160 = pnand %p158, %p159
      %p161 = pneg %p160
      // Predicated region
      $region9: #{tpu_custom_call.1} parent=5 // pred_check
        _
      $region10: #{tpu_custom_call.1} parent=5 // pred_check_branch
        %163 = sbr.rel (%p160) target = $region12
      $region11: #{tpu_custom_call.1} parent=5 // pred_region
        %s164 = ssub.s32 %s14, 1
        // Predicated region
        $region13: #{tpu_custom_call.1} parent=11 // pred_check
          %p165 = pneg %p61
        $region14: #{tpu_custom_call.1} parent=11 // pred_check_branch
          %167 = sbr.rel (%p165) target = $region16
        $region15: #{tpu_custom_call.1} parent=11 // pred_region
          _
        $region16: #{tpu_custom_call.1} parent=11 // pred_fallthru
          _
        // Predicated region
        $region17: #{tpu_custom_call.1} parent=11 // pred_check
          %p168 = pneg %p82
        $region18: #{tpu_custom_call.1} parent=11 // pred_check_branch
          %170 = sbr.rel (%p168) target = $region20
        $region19: #{tpu_custom_call.1} parent=11 // pred_region
          _
        $region20: #{tpu_custom_call.1} parent=11 // pred_fallthru
          _
        // Predicated region
        $region21: #{tpu_custom_call.1} parent=11 // pred_check
          %p171 = pneg %p103
        $region22: #{tpu_custom_call.1} parent=11 // pred_check_branch
          %173 = sbr.rel (%p171) target = $region24
        $region23: #{tpu_custom_call.1} parent=11 // pred_region
          _
        $region24: #{tpu_custom_call.1} parent=11 // pred_fallthru
          _
        // Predicated region
        $region25: #{tpu_custom_call.1} parent=11 // pred_check
          %p174 = pneg %p124
        $region26: #{tpu_custom_call.1} parent=11 // pred_check_branch
          %176 = sbr.rel (%p174) target = $region28
        $region27: #{tpu_custom_call.1} parent=11 // pred_region
          _
        $region28: #{tpu_custom_call.1} parent=11 // pred_fallthru
          _
      $region12: #{tpu_custom_call.1} parent=5 // pred_fallthru
        _
      %p177 = scmp.lt.s32.totalorder %s14, 2
      // Predicated region
      $region29: #{tpu_custom_call.1} parent=5 // pred_check
        %p178 = pneg %p177
      $region30: #{tpu_custom_call.1} parent=5 // pred_check_branch
        %180 = sbr.rel (%p178) target = $region32
      $region31: #{tpu_custom_call.1} parent=5 // pred_region
        // Predicated region
        $region33: #{tpu_custom_call.1} parent=31 // pred_check
          %p181 = pneg %p34
        $region34: #{tpu_custom_call.1} parent=31 // pred_check_branch
          %183 = sbr.rel (%p181) target = $region36
        $region35: #{tpu_custom_call.1} parent=31 // pred_region
          %p184 = scmp.lt.s32.totalorder %s14, 1
          %s185 = scalar_select %p184, %s14, 1
          %s186 = smul.addr %s185, 2
          %s187 = smul.addr %s186, 4
          %s188 = scalar_lea.vmem %s0, %s187
        $region36: #{tpu_custom_call.1} parent=31 // pred_fallthru
          _
      $region32: #{tpu_custom_call.1} parent=5 // pred_fallthru
        _
      %p189 = scmp.le.s32.totalorder 1, %s14
      %p190 = scmp.lt.s32.totalorder %s14, 3
      %p191 = pnand %p189, %p190
      %p192 = pneg %p191
      // Predicated region
      $region37: #{tpu_custom_call.1} parent=5 // pred_check
        _
      $region38: #{tpu_custom_call.1} parent=5 // pred_check_branch
        %194 = sbr.rel (%p191) target = $region40
      $region39: #{tpu_custom_call.1} parent=5 // pred_region
        %s195 = ssub.s32 %s14, 1
        %p196 = scmp.lt.s32.totalorder %s19, 1
        %s197 = scalar_select %p196, %s19, 1
        %s198 = smul.addr %s197, 2
        %s199 = smul.addr %s198, 4
        %s200 = scalar_lea.vmem %s0, %s199
        %p201 = pneg %p40
        %p202 = pneg %p37
        %p203 = pneg %p61
        %p204 = pneg %p58
        %p205 = pneg %p82
        %p206 = pneg %p79
        %p207 = pneg %p103
        %p208 = pneg %p100
        %p209 = pneg %p124
        %p210 = pneg %p121
        %p211 = pneg %p150
        %p212 = pneg %p147
        %s213 = sand.u32 %s137, 1
        %s214 = scalar_lea.sflag [#allocation4], %s213
        %s215 = sand.u32 %s137, 1
        %s216 = smul.addr %s215, 16
        %s217 = scalar_lea.vmem [#allocation3], %s216
        %p218 = scmp.lt.s32.totalorder %s19, 1
        %s219 = scalar_select %p218, %s19, 1
        %s220 = smul.addr %s219, 2
        %s221 = smul.addr %s220, 4
        %s222 = scalar_lea.vmem %s0, %s221
        %v223 = vld [vmem:[%s222] sm:$0xff]
        %v224 = vld [vmem:[%s1] sm:$0xff]
        %v225 = vld [vmem:[%s1 + $0x8] sm:$0xff]
        %v226 = vld [vmem:[%s1 + $0x10] sm:$0xff]
        %v227 = vld [vmem:[%s1 + $0x18] sm:$0xff]
        %v228 = vld [vmem:[%s2] sm:$0xff]
        %v229 = vld [vmem:[%s2 + $0x8] sm:$0xff]
        %v230 = vld [vmem:[%s2 + $0x10] sm:$0xff]
        %v231 = vld [vmem:[%s2 + $0x18] sm:$0xff]
        %v232 = vld [vmem:[%s2 + $0x20] sm:$0xff]
        %v233 = vld [vmem:[%s2 + $0x28] sm:$0xff]
        %v234 = vld [vmem:[%s2 + $0x30] sm:$0xff]
        %v235 = vld [vmem:[%s2 + $0x38] sm:$0xff]
        %v236 = vld [vmem:[%s2 + $0x40] sm:$0xff]
        %v237 = vld [vmem:[%s3] sm:$0xff]
        %v238 = vld [vmem:[%s3 + $0x8] sm:$0xff]
        %v239 = vld [vmem:[%s3 + $0x10] sm:$0xff]
        %v240 = vld [vmem:[%s3 + $0x18] sm:$0xff]
        %v241 = vld [vmem:[%s3 + $0x20] sm:$0xff]
        %v242 = vld [vmem:[%s3 + $0x28] sm:$0xff]
        %v243 = vld [vmem:[%s3 + $0x30] sm:$0xff]
        %v244 = vld [vmem:[%s3 + $0x38] sm:$0xff]
        %v245 = vld [vmem:[%s4] sm:$0xff]
        %v246 = vld [vmem:[%s4 + $0x8] sm:$0xff]
        %v247 = vld [vmem:[%s4 + $0x10] sm:$0xff]
        %249 = vset.pattern.permute.xlu0 0
        %250 = vperm.xlu0 %249, %v224
        %v251 = vpop.permute.xlu0 %250
        %v254 = vlaneseq
        %v255 = vshrl.u32 %v254, 7
        %v256 = vsub.s32 0, %v255
        %v257 = vrot.slane %v223, %v256
        %v258 = vlaneseq
        %v259 = vshrl.u32 %v258, 7
        %v260 = vsub.s32 4, %v259
        %v261 = vrot.slane %v223, %v260
        %v264 = vlaneseq
        %v265 = vshrl.u32 %v264, 7
        %v266 = vsub.s32 0, %v265
        %v267 = vrot.slane %v257, %v266
        %v268 = vlaneseq
        %v269 = vshrl.u32 %v268, 7
        %v270 = vsub.s32 0, %v269
        %v271 = vrot.slane %v261, %v270
        %v272 = vmul.f32 %v251, %v267
        %v273 = vmul.f32 %v251, %v271
        %275 = vset.pattern.permute.xlu0 0
        %276 = vperm.xlu0 %275, %v225
        %v277 = vpop.permute.xlu0 %276
        %v279 = vlaneseq
        %v280 = vshrl.u32 %v279, 7
        %v281 = vsub.s32 1, %v280
        %v282 = vrot.slane %v223, %v281
        %v283 = vlaneseq
        %v284 = vshrl.u32 %v283, 7
        %v285 = vsub.s32 5, %v284
        %v286 = vrot.slane %v223, %v285
        %v289 = vlaneseq
        %v290 = vshrl.u32 %v289, 7
        %v291 = vsub.s32 1, %v290
        %v292 = vrot.slane %v282, %v291
        %v293 = vlaneseq
        %v294 = vshrl.u32 %v293, 7
        %v295 = vsub.s32 1, %v294
        %v296 = vrot.slane %v286, %v295
        %v297 = vmul.f32 %v277, %v292
        %v298 = vmul.f32 %v277, %v296
        %v299 = vadd.f32 %v272, %v297
        %v300 = vadd.f32 %v273, %v298
        %302 = vset.pattern.permute.xlu0 0
        %303 = vperm.xlu0 %302, %v226
        %v304 = vpop.permute.xlu0 %303
        %v306 = vlaneseq
        %v307 = vshrl.u32 %v306, 7
        %v308 = vsub.s32 2, %v307
        %v309 = vrot.slane %v223, %v308
        %v310 = vlaneseq
        %v311 = vshrl.u32 %v310, 7
        %v312 = vsub.s32 6, %v311
        %v313 = vrot.slane %v223, %v312
        %v316 = vlaneseq
        %v317 = vshrl.u32 %v316, 7
        %v318 = vsub.s32 2, %v317
        %v319 = vrot.slane %v309, %v318
        %v320 = vlaneseq
        %v321 = vshrl.u32 %v320, 7
        %v322 = vsub.s32 2, %v321
        %v323 = vrot.slane %v313, %v322
        %v324 = vmul.f32 %v304, %v319
        %v325 = vmul.f32 %v304, %v323
        %v326 = vadd.f32 %v299, %v324
        %v327 = vadd.f32 %v300, %v325
        %329 = vset.pattern.permute.xlu0 0
        %330 = vperm.xlu0 %329, %v227
        %v331 = vpop.permute.xlu0 %330
        %v333 = vlaneseq
        %v334 = vshrl.u32 %v333, 7
        %v335 = vsub.s32 3, %v334
        %v336 = vrot.slane %v223, %v335
        %v337 = vlaneseq
        %v338 = vshrl.u32 %v337, 7
        %v339 = vsub.s32 7, %v338
        %v340 = vrot.slane %v223, %v339
        %v343 = vlaneseq
        %v344 = vshrl.u32 %v343, 7
        %v345 = vsub.s32 3, %v344
        %v346 = vrot.slane %v336, %v345
        %v347 = vlaneseq
        %v348 = vshrl.u32 %v347, 7
        %v349 = vsub.s32 3, %v348
        %v350 = vrot.slane %v340, %v349
        %v351 = vmul.f32 %v331, %v346
        %v352 = vmul.f32 %v331, %v350
        %v353 = vadd.f32 %v326, %v351
        %v354 = vadd.f32 %v327, %v352
        %356 = vset.pattern.permute.xlu0 0
        %357 = vperm.xlu0 %356, %v245
        %v358 = vpop.permute.xlu0 %357
        %v360 = vadd.f32 %v353, %v358
        %v361 = vadd.f32 %v354, %v358
        %vm362 = vcmp.gt.f32.partialorder %v360, 0.0
        %vm363 = vcmp.gt.f32.partialorder %v361, 0.0
        %v364 = vmul.f32 %v360, 0.3
        %v365 = vmul.f32 %v361, 0.3
        %v366 = vsel %vm362, %v360, %v364
        %v367 = vsel %vm363, %v361, %v365
        %368 = vst [vmem:[#allocation2 + $0x8] sm:$0xff] %v366
        %369 = vst [vmem:[#allocation2 + $0x10] sm:$0xff] %v367
        %v370 = vlaneseq
        %v371 = vand.u32 %v370, 127
        %v372 = vadd.s32 %v371, 128
        %v373 = vand.u32 %v371, 15
        %v374 = vand.u32 %v372, 15
        %vm375 = vcmp.ge.s32.totalorder %v371, 16
        %vm376 = vcmp.ge.s32.totalorder %v372, 16
        %vm377 = vcmp.lt.s32.totalorder %v371, 240
        %vm378 = vcmp.lt.s32.totalorder %v372, 240
        %vm379 = vcmp.ge.s32.totalorder %v373, 1
        %vm380 = vcmp.ge.s32.totalorder %v374, 1
        %vm381 = vcmp.le.s32.totalorder %v373, 14
        %vm382 = vcmp.le.s32.totalorder %v374, 14
        %384 = vset.pattern.permute.xlu0 0
        %385 = vperm.xlu0 %384, %v232
        %v386 = vpop.permute.xlu0 %385
        %v388 = vmul.f32 %v366, %v386
        %v389 = vmul.f32 %v367, %v386
        %v390 = vld [vmem:[#allocation2] sm:$0xff]
        %v391 = vld [vmem:[#allocation2 + $0x8] sm:$0xff]
        %v392 = vld [vmem:[#allocation2 + $0x10] sm:$0xff]
        %vm393 = vmand %vm375, %vm379
        %vm394 = vmand %vm376, %vm380
        %398 = vrot.lane.b32.xlu0 %v390, 17
        %v399 = vpop.permute.xlu0 %398
        %400 = vrot.lane.b32.xlu0 %v391, 17
        %v401 = vpop.permute.xlu0 %400
        %402 = vrot.lane.b32.xlu0 %v392, 17
        %v403 = vpop.permute.xlu0 %402
        %vm404 = vcmask 138240
        %v405 = vsel %vm404, %v399, %v401
        %v406 = vsel %vm404, %v401, %v403
        %v409 = vsel %vm393, %v405, 0.0
        %v410 = vsel %vm394, %v406, 0.0
        %412 = vset.pattern.permute.xlu0 0
        %413 = vperm.xlu0 %412, %v228
        %v414 = vpop.permute.xlu0 %413
        %v416 = vmul.f32 %v409, %v414
        %v417 = vmul.f32 %v410, %v414
        %v418 = vadd.f32 %v388, %v416
        %v419 = vadd.f32 %v389, %v417
        %420 = vrot.lane.b32.xlu0 %v390, 16
        %v421 = vpop.permute.xlu0 %420
        %422 = vrot.lane.b32.xlu0 %v391, 16
        %v423 = vpop.permute.xlu0 %422
        %424 = vrot.lane.b32.xlu0 %v392, 16
        %v425 = vpop.permute.xlu0 %424
        %vm426 = vcmask 130048
        %v427 = vsel %vm426, %v421, %v423
        %v428 = vsel %vm426, %v423, %v425
        %v431 = vsel %vm375, %v427, 0.0
        %v432 = vsel %vm376, %v428, 0.0
        %434 = vset.pattern.permute.xlu0 0
        %435 = vperm.xlu0 %434, %v229
        %v436 = vpop.permute.xlu0 %435
        %v438 = vmul.f32 %v431, %v436
        %v439 = vmul.f32 %v432, %v436
        %v440 = vadd.f32 %v418, %v438
        %v441 = vadd.f32 %v419, %v439
        %vm442 = vmand %vm375, %vm381
        %vm443 = vmand %vm376, %vm382
        %444 = vrot.lane.b32.xlu0 %v390, 15
        %v445 = vpop.permute.xlu0 %444
        %446 = vrot.lane.b32.xlu0 %v391, 15
        %v447 = vpop.permute.xlu0 %446
        %448 = vrot.lane.b32.xlu0 %v392, 15
        %v449 = vpop.permute.xlu0 %448
        %vm450 = vcmask 121856
        %v451 = vsel %vm450, %v445, %v447
        %v452 = vsel %vm450, %v447, %v449
        %v455 = vsel %vm442, %v451, 0.0
        %v456 = vsel %vm443, %v452, 0.0
        %458 = vset.pattern.permute.xlu0 0
        %459 = vperm.xlu0 %458, %v230
        %v460 = vpop.permute.xlu0 %459
        %v462 = vmul.f32 %v455, %v460
        %v463 = vmul.f32 %v456, %v460
        %v464 = vadd.f32 %v440, %v462
        %v465 = vadd.f32 %v441, %v463
        %466 = vrot.lane.b32.xlu0 %v390, 1
        %v467 = vpop.permute.xlu0 %466
        %468 = vrot.lane.b32.xlu0 %v391, 1
        %v469 = vpop.permute.xlu0 %468
        %470 = vrot.lane.b32.xlu0 %v392, 1
        %v471 = vpop.permute.xlu0 %470
        %vm472 = vcmask 7168
        %v473 = vsel %vm472, %v467, %v469
        %v474 = vsel %vm472, %v469, %v471
        %v477 = vsel %vm379, %v473, 0.0
        %v478 = vsel %vm380, %v474, 0.0
        %480 = vset.pattern.permute.xlu0 0
        %481 = vperm.xlu0 %480, %v231
        %v482 = vpop.permute.xlu0 %481
        %v484 = vmul.f32 %v477, %v482
        %v485 = vmul.f32 %v478, %v482
        %v486 = vadd.f32 %v464, %v484
        %v487 = vadd.f32 %v465, %v485
        %v488 = vld [vmem:[#allocation2 + $0x8] sm:$0xff]
        %v489 = vld [vmem:[#allocation2 + $0x10] sm:$0xff]
        %v490 = vld [vmem:[#allocation2 + $0x18] sm:$0xff]
        %494 = vrot.lane.b32.xlu0 %v488, 127
        %v495 = vpop.permute.xlu0 %494
        %496 = vrot.lane.b32.xlu0 %v489, 127
        %v497 = vpop.permute.xlu0 %496
        %498 = vrot.lane.b32.xlu0 %v490, 127
        %v499 = vpop.permute.xlu0 %498
        %vm500 = vcmask 1039360
        %v501 = vsel %vm500, %v495, %v497
        %v502 = vsel %vm500, %v497, %v499
        %v505 = vsel %vm381, %v501, 0.0
        %v506 = vsel %vm382, %v502, 0.0
        %508 = vset.pattern.permute.xlu0 0
        %509 = vperm.xlu0 %508, %v233
        %v510 = vpop.permute.xlu0 %509
        %v512 = vmul.f32 %v505, %v510
        %v513 = vmul.f32 %v506, %v510
        %v514 = vadd.f32 %v486, %v512
        %v515 = vadd.f32 %v487, %v513
        %vm516 = vmand %vm377, %vm379
        %vm517 = vmand %vm378, %vm380
        %518 = vrot.lane.b32.xlu0 %v488, 113
        %v519 = vpop.permute.xlu0 %518
        %520 = vrot.lane.b32.xlu0 %v489, 113
        %v521 = vpop.permute.xlu0 %520
        %522 = vrot.lane.b32.xlu0 %v490, 113
        %v523 = vpop.permute.xlu0 %522
        %vm524 = vcmask 924672
        %v525 = vsel %vm524, %v519, %v521
        %v526 = vsel %vm524, %v521, %v523
        %v529 = vsel %vm516, %v525, 0.0
        %v530 = vsel %vm517, %v526, 0.0
        %532 = vset.pattern.permute.xlu0 0
        %533 = vperm.xlu0 %532, %v234
        %v534 = vpop.permute.xlu0 %533
        %v536 = vmul.f32 %v529, %v534
        %v537 = vmul.f32 %v530, %v534
        %v538 = vadd.f32 %v514, %v536
        %v539 = vadd.f32 %v515, %v537
        %540 = vrot.lane.b32.xlu0 %v488, 112
        %v541 = vpop.permute.xlu0 %540
        %542 = vrot.lane.b32.xlu0 %v489, 112
        %v543 = vpop.permute.xlu0 %542
        %544 = vrot.lane.b32.xlu0 %v490, 112
        %v545 = vpop.permute.xlu0 %544
        %vm546 = vcmask 916480
        %v547 = vsel %vm546, %v541, %v543
        %v548 = vsel %vm546, %v543, %v545
        %v551 = vsel %vm377, %v547, 0.0
        %v552 = vsel %vm378, %v548, 0.0
        %554 = vset.pattern.permute.xlu0 0
        %555 = vperm.xlu0 %554, %v235
        %v556 = vpop.permute.xlu0 %555
        %v558 = vmul.f32 %v551, %v556
        %v559 = vmul.f32 %v552, %v556
        %v560 = vadd.f32 %v538, %v558
        %v561 = vadd.f32 %v539, %v559
        %vm562 = vmand %vm377, %vm381
        %vm563 = vmand %vm378, %vm382
        %564 = vrot.lane.b32.xlu0 %v488, 111
        %v565 = vpop.permute.xlu0 %564
        %566 = vrot.lane.b32.xlu0 %v489, 111
        %v567 = vpop.permute.xlu0 %566
        %568 = vrot.lane.b32.xlu0 %v490, 111
        %v569 = vpop.permute.xlu0 %568
        %vm570 = vcmask 908288
        %v571 = vsel %vm570, %v565, %v567
        %v572 = vsel %vm570, %v567, %v569
        %v575 = vsel %vm562, %v571, 0.0
        %v576 = vsel %vm563, %v572, 0.0
        %578 = vset.pattern.permute.xlu0 0
        %579 = vperm.xlu0 %578, %v236
        %v580 = vpop.permute.xlu0 %579
        %v582 = vmul.f32 %v575, %v580
        %v583 = vmul.f32 %v576, %v580
        %v584 = vadd.f32 %v560, %v582
        %v585 = vadd.f32 %v561, %v583
        %587 = vset.pattern.permute.xlu0 0
        %588 = vperm.xlu0 %587, %v246
        %v589 = vpop.permute.xlu0 %588
        %v591 = vadd.f32 %v584, %v589
        %v592 = vadd.f32 %v585, %v589
        %vm593 = vcmp.gt.f32.partialorder %v591, 0.0
        %vm594 = vcmp.gt.f32.partialorder %v592, 0.0
        %v595 = vmul.f32 %v591, 0.3
        %v596 = vmul.f32 %v592, 0.3
        %v597 = vsel %vm593, %v591, %v595
        %v598 = vsel %vm594, %v592, %v596
        %600 = vset.pattern.permute.xlu0 0
        %601 = vperm.xlu0 %600, %v237
        %v602 = vpop.permute.xlu0 %601
        %v604 = vlaneseq
        %v605 = vshrl.u32 %v604, 7
        %v606 = vsub.s32 0, %v605
        %v607 = vrot.slane %v597, %v606
        %v608 = vlaneseq
        %v609 = vshrl.u32 %v608, 7
        %v610 = vsub.s32 0, %v609
        %v611 = vrot.slane %v598, %v610
        %v612 = vmul.f32 %v602, %v607
        %v613 = vmul.f32 %v602, %v611
        %615 = vset.pattern.permute.xlu0 0
        %616 = vperm.xlu0 %615, %v238
        %v617 = vpop.permute.xlu0 %616
        %v619 = vlaneseq
        %v620 = vshrl.u32 %v619, 7
        %v621 = vsub.s32 1, %v620
        %v622 = vrot.slane %v597, %v621
        %v623 = vlaneseq
        %v624 = vshrl.u32 %v623, 7
        %v625 = vsub.s32 1, %v624
        %v626 = vrot.slane %v598, %v625
        %v627 = vmul.f32 %v617, %v622
        %v628 = vmul.f32 %v617, %v626
        %v629 = vadd.f32 %v612, %v627
        %v630 = vadd.f32 %v613, %v628
        %632 = vset.pattern.permute.xlu0 0
        %633 = vperm.xlu0 %632, %v239
        %v634 = vpop.permute.xlu0 %633
        %v636 = vlaneseq
        %v637 = vshrl.u32 %v636, 7
        %v638 = vsub.s32 2, %v637
        %v639 = vrot.slane %v597, %v638
        %v640 = vlaneseq
        %v641 = vshrl.u32 %v640, 7
        %v642 = vsub.s32 2, %v641
        %v643 = vrot.slane %v598, %v642
        %v644 = vmul.f32 %v634, %v639
        %v645 = vmul.f32 %v634, %v643
        %v646 = vadd.f32 %v629, %v644
        %v647 = vadd.f32 %v630, %v645
        %649 = vset.pattern.permute.xlu0 0
        %650 = vperm.xlu0 %649, %v240
        %v651 = vpop.permute.xlu0 %650
        %v653 = vlaneseq
        %v654 = vshrl.u32 %v653, 7
        %v655 = vsub.s32 3, %v654
        %v656 = vrot.slane %v597, %v655
        %v657 = vlaneseq
        %v658 = vshrl.u32 %v657, 7
        %v659 = vsub.s32 3, %v658
        %v660 = vrot.slane %v598, %v659
        %v661 = vmul.f32 %v651, %v656
        %v662 = vmul.f32 %v651, %v660
        %v663 = vadd.f32 %v646, %v661
        %v664 = vadd.f32 %v647, %v662
        %666 = vset.pattern.permute.xlu0 0
        %667 = vperm.xlu0 %666, %v241
        %v668 = vpop.permute.xlu0 %667
        %v670 = vlaneseq
        %v671 = vshrl.u32 %v670, 7
        %v672 = vsub.s32 4, %v671
        %v673 = vrot.slane %v597, %v672
        %v674 = vlaneseq
        %v675 = vshrl.u32 %v674, 7
        %v676 = vsub.s32 4, %v675
        %v677 = vrot.slane %v598, %v676
        %v678 = vmul.f32 %v668, %v673
        %v679 = vmul.f32 %v668, %v677
        %v680 = vadd.f32 %v663, %v678
        %v681 = vadd.f32 %v664, %v679
        %683 = vset.pattern.permute.xlu0 0
        %684 = vperm.xlu0 %683, %v242
        %v685 = vpop.permute.xlu0 %684
        %v687 = vlaneseq
        %v688 = vshrl.u32 %v687, 7
        %v689 = vsub.s32 5, %v688
        %v690 = vrot.slane %v597, %v689
        %v691 = vlaneseq
        %v692 = vshrl.u32 %v691, 7
        %v693 = vsub.s32 5, %v692
        %v694 = vrot.slane %v598, %v693
        %v695 = vmul.f32 %v685, %v690
        %v696 = vmul.f32 %v685, %v694
        %v697 = vadd.f32 %v680, %v695
        %v698 = vadd.f32 %v681, %v696
        %700 = vset.pattern.permute.xlu0 0
        %701 = vperm.xlu0 %700, %v243
        %v702 = vpop.permute.xlu0 %701
        %v704 = vlaneseq
        %v705 = vshrl.u32 %v704, 7
        %v706 = vsub.s32 6, %v705
        %v707 = vrot.slane %v597, %v706
        %v708 = vlaneseq
        %v709 = vshrl.u32 %v708, 7
        %v710 = vsub.s32 6, %v709
        %v711 = vrot.slane %v598, %v710
        %v712 = vmul.f32 %v702, %v707
        %v713 = vmul.f32 %v702, %v711
        %v714 = vadd.f32 %v697, %v712
        %v715 = vadd.f32 %v698, %v713
        %717 = vset.pattern.permute.xlu0 0
        %718 = vperm.xlu0 %717, %v244
        %v719 = vpop.permute.xlu0 %718
        %v721 = vlaneseq
        %v722 = vshrl.u32 %v721, 7
        %v723 = vsub.s32 7, %v722
        %v724 = vrot.slane %v597, %v723
        %v725 = vlaneseq
        %v726 = vshrl.u32 %v725, 7
        %v727 = vsub.s32 7, %v726
        %v728 = vrot.slane %v598, %v727
        %v729 = vmul.f32 %v719, %v724
        %v730 = vmul.f32 %v719, %v728
        %v731 = vadd.f32 %v714, %v729
        %v732 = vadd.f32 %v715, %v730
        %734 = vset.pattern.permute.xlu0 0
        %735 = vperm.xlu0 %734, %v247
        %v736 = vpop.permute.xlu0 %735
        %v738 = vadd.f32 %v731, %v736
        %v739 = vadd.f32 %v732, %v736
        %vm740 = vcmp.gt.f32.partialorder %v738, 0.0
        %vm741 = vcmp.gt.f32.partialorder %v739, 0.0
        %v742 = vmul.f32 %v738, 0.3
        %v743 = vmul.f32 %v739, 0.3
        %v744 = vsel %vm740, %v738, %v742
        %v745 = vsel %vm741, %v739, %v743
        %746 = vst [vmem:[%s217] sm:$0xff] %v744
        %747 = vst [vmem:[%s217 + $0x8] sm:$0xff] %v745
        %s748 = sand.u32 %s137, 1
        %s749 = scalar_lea.sflag [#allocation4], %s748
        %s750 = sand.u32 %s137, 1
        %s751 = smul.addr %s750, 16
        %s752 = scalar_lea.vmem [#allocation3], %s751
        // Predicated region
        $region41: #{tpu_custom_call.1} parent=39 // pred_check
          %p753 = pneg %p147
        $region42: #{tpu_custom_call.1} parent=39 // pred_check_branch
          %755 = sbr.rel (%p753) target = $region44
        $region43: #{tpu_custom_call.1} parent=39 // pred_region
          %s757 = ssub.s32 256, 256
          %758 = vsyncadd %s749, %s757
          %s759 = smul.addr %s19, 2
          %s760 = smul.addr %s759, 128
          %s761 = scalar_lea.hbm %s5, %s760
          %s763 = sshll.u32 %s752, 4
          %s764 = int_to_ptr.vmem [resolvable:$true] %s763
          %766 = dma.vmem_to_hbm [thread:$0]  %s764, 256, %s761, %s749
        $region44: #{tpu_custom_call.1} parent=39 // pred_fallthru
          _
      $region40: #{tpu_custom_call.1} parent=5 // pred_fallthru
        _
      %p767 = scmp.le.s32.totalorder 2, %s14
      // Predicated region
      $region45: #{tpu_custom_call.1} parent=5 // pred_check
        %p768 = pneg %p767
      $region46: #{tpu_custom_call.1} parent=5 // pred_check_branch
        %770 = sbr.rel (%p768) target = $region48
      $region47: #{tpu_custom_call.1} parent=5 // pred_region
        %s771 = ssub.s32 %s14, 2
        // Predicated region
        $region49: #{tpu_custom_call.1} parent=47 // pred_check
          %p772 = pneg %p153
        $region50: #{tpu_custom_call.1} parent=47 // pred_check_branch
          %774 = sbr.rel (%p772) target = $region52
        $region51: #{tpu_custom_call.1} parent=47 // pred_region
          %s775 = sand.u32 %s138, 1
          %s776 = scalar_lea.sflag [#allocation4], %s775
          %s777 = sand.u32 %s138, 1
          %s778 = smul.addr %s777, 16
          %s779 = scalar_lea.vmem [#allocation3], %s778
          %780 = dma.done %s776, 256
        $region52: #{tpu_custom_call.1} parent=47 // pred_fallthru
          _
      $region48: #{tpu_custom_call.1} parent=5 // pred_fallthru
        _
    $region6: #{tpu_custom_call.1} parent=1 // loop_footer
      %s18 = sadd.s32 1, %s14
    $region7: #{tpu_custom_call.1} parent=1 // loop_footer_branch
      %13 = sbr.rel target = $region3
    $region8: #{tpu_custom_call.1} parent=1 // loop_exit
      _
    %781 = vsyncpa [#allocation4], 1
    %s782 = scalar_lea.sflag [#allocation4], 1
    %783 = vsyncpa %s782, 1

</llo_original>
